<compile_context>
chip_gen: v6e
topology: v6e:2x2x1
jax: 0.10.0
libtpu: 0.0.40
codegen_flags: <defaults>
</compile_context>

<pallas_src>
import functools

import jax
import jax.numpy as jnp
import numpy as np
from jax.experimental import pallas as pl
from jax.experimental.pallas import tpu as pltpu


def _round_up(v: int, m: int) -> int:
    return (v + m - 1) // m * m


def readout_kernel(bi_ref, x_ref, inv_ref, out_ref, acc_ref):
    """One (d-tile, n-tile) grid step of the segment-mean.

    bi_ref : (1, TILE_N) int32   graph id per node (-1 for padding)
    x_ref  : (TILE_N, TILE_D)    node features
    inv_ref: (B_pad, 1) f32      1 / max(count_b, 1)
    out_ref: (B_pad, TILE_D)     per-graph mean (written at the last n-tile)
    acc_ref: (B_pad, TILE_D) f32 resident accumulator scratch
    """
    k = pl.program_id(1)  # reduction axis over node tiles (last grid axis)

    @pl.when(k == 0)
    def _():
        acc_ref[...] = jnp.zeros_like(acc_ref)

    bi = bi_ref[...]                      # (1, TILE_N) int32
    x = x_ref[...]                        # (TILE_N, TILE_D)
    b_pad = acc_ref.shape[0]
    tile_n = x.shape[0]

    # (B_pad, TILE_N) one-hot assignment; padded nodes (id == -1) match nothing.
    graph_ids = jax.lax.broadcasted_iota(jnp.int32, (b_pad, tile_n), 0)
    onehot = (graph_ids == bi).astype(x.dtype)          # exact 0/1, lossless

    # Per-graph partial sums on the MXU, accumulated in f32.
    acc_ref[...] += jnp.dot(onehot, x, preferred_element_type=jnp.float32)

    @pl.when(k == pl.num_programs(1) - 1)
    def _():
        out_ref[...] = (acc_ref[...] * inv_ref[...]).astype(out_ref.dtype)


@functools.partial(jax.jit, static_argnames=("num_graphs",))
def readout(x, batch_index, num_graphs):
    """Pallas implementation of ReadOut.forward (per-graph mean of node rows).

    Args:
      x: (N, D) node features.
      batch_index: (N,) int graph assignment per node (values in [0, B)).
      num_graphs: static Python int, == batch_index[-1] + 1.

    Returns:
      (num_graphs, D) per-graph mean of node features.
    """
    n, d = x.shape
    b = num_graphs

    # ---- layout: lane-dense D, sublane-aligned B, tileable N -------------
    d_pad = _round_up(d, 128)
    b_pad = _round_up(b, 8)

    tile_n_target = 512
    if n <= tile_n_target:
        tile_n = _round_up(max(n, 8), 8)
        n_pad = tile_n
    else:
        tile_n = tile_n_target
        n_pad = _round_up(n, tile_n)

    if d_pad <= 512:
        tile_d = d_pad
    elif d_pad % 512 == 0:
        tile_d = 512
    elif d_pad % 256 == 0:
        tile_d = 256
    else:
        tile_d = 128

    # ---- pad inputs (zeros contribute nothing; pad nodes get id -1) ------
    x_p = x
    if (n_pad, d_pad) != (n, d):
        x_p = jnp.zeros((n_pad, d_pad), x.dtype).at[:n, :d].set(x)
    bi_p = jnp.full((1, n_pad), -1, dtype=jnp.int32)
    bi_p = bi_p.at[0, :n].set(batch_index.astype(jnp.int32))

    # Per-graph counts -> reciprocal, computed once outside the hot loop.
    counts = jnp.zeros((b,), jnp.float32).at[batch_index].add(1.0)
    inv = 1.0 / jnp.maximum(counts, 1.0)   # empty graph -> 0 output, not NaN
    inv_p = jnp.zeros((b_pad, 1), jnp.float32).at[:b, 0].set(inv)

    grid = (d_pad // tile_d, n_pad // tile_n)   # (parallel D, reduction N last)

    itemsize = jnp.dtype(x.dtype).itemsize
    vmem_bytes = (
        2 * tile_n * tile_d * itemsize      # x tile, double-buffered
        + 2 * tile_n * 4                    # batch index tile, double-buffered
        + 2 * b_pad * 4                     # inv counts, double-buffered
        + 2 * b_pad * tile_d * itemsize     # output tile, double-buffered
        + b_pad * tile_d * 4                # f32 accumulator scratch
    )
    vmem_limit = int(min(64 * 1024 * 1024,
                         max(16 * 1024 * 1024, 2 * vmem_bytes)))

    out_p = pl.pallas_call(
        readout_kernel,
        out_shape=jax.ShapeDtypeStruct((b_pad, d_pad), x.dtype),
        grid_spec=pltpu.PrefetchScalarGridSpec(
            num_scalar_prefetch=0,
            grid=grid,
            in_specs=[
                pl.BlockSpec((1, tile_n), lambda j, k: (0, k)),        # batch ids
                pl.BlockSpec((tile_n, tile_d), lambda j, k: (k, j)),   # x
                pl.BlockSpec((b_pad, 1), lambda j, k: (0, 0)),         # 1/counts
            ],
            out_specs=pl.BlockSpec((b_pad, tile_d), lambda j, k: (0, j)),
            scratch_shapes=[pltpu.VMEM((b_pad, tile_d), jnp.float32)],
        ),
        compiler_params=pltpu.CompilerParams(
            dimension_semantics=("parallel", "arbitrary"),
            vmem_limit_bytes=vmem_limit,
        ),
        cost_estimate=pl.CostEstimate(
            flops=2 * b_pad * n_pad * d_pad,
            transcendentals=0,
            bytes_accessed=(n_pad * d_pad * itemsize + n_pad * 4
                            + b_pad * d_pad * itemsize),
        ),
    )(bi_p, x_p, inv_p)

    return out_p[:b, :d]


def _segment_mean_ref(x, batch_index, b):
    return jnp.stack(
        [x[batch_index == i].mean(axis=0) for i in range(b)], axis=0)


if __name__ == "__main__":
    key = jax.random.PRNGKey(0)

    # ---- test 1: small example matching the module's forward -------------
    # 4 graphs, 4 nodes each -> N = 16 nodes, D = 32 features.
    num_graphs = 4
    nodes_per_graph = 4
    n, d = num_graphs * nodes_per_graph, 32

    x = jax.random.normal(key, (n, d), dtype=jnp.float32)
    batch_index = jnp.repeat(jnp.arange(num_graphs, dtype=jnp.int32),
                             nodes_per_graph)

    out = jax.block_until_ready(readout(x, batch_index, num_graphs))
    ref = _segment_mean_ref(x, batch_index, num_graphs)
    assert out.shape == (num_graphs, d)
    assert jnp.allclose(out, ref, atol=1e-5, rtol=1e-5)

    # ---- test 2: multi-tile / padded path (exercises the N grid) ---------
    key2 = jax.random.PRNGKey(0)
    counts2 = np.array([200, 300, 100, 240, 200], dtype=np.int32)  # N = 1040
    b2, n2, d2 = len(counts2), int(counts2.sum()), 160
    x2 = jax.random.normal(key2, (n2, d2), dtype=jnp.float32)
    bi2 = jnp.asarray(np.repeat(np.arange(b2, dtype=np.int32), counts2))

    out2 = jax.block_until_ready(readout(x2, bi2, b2))
    ref2 = _segment_mean_ref(x2, bi2, b2)
    assert out2.shape == (b2, d2)
    assert jnp.allclose(out2, ref2, atol=1e-4, rtol=1e-4)

    print("KERNEL_OK")
</pallas_src>

<mosaic_0001>
module attributes {stable_mosaic.version = 11 : i64} {
  func.func private @main(%arg0: i32) attributes {dimension_semantics = [#tpu.dimension_semantics<core_parallel>], iteration_bounds = array<i64: 2>, tpu.core_type = #tpu.core_type<sc_scalar_subcore>, window_params = []} {
    return
  }
}

module attributes {stable_mosaic.version = 11 : i64} {
  func.func private @main(%arg0: i32) attributes {dimension_semantics = [#tpu.dimension_semantics<core_parallel>], iteration_bounds = array<i64: 2>, tpu.core_type = #tpu.core_type<sc_scalar_subcore>, window_params = []} {
    return
  }
}

module attributes {stable_mosaic.version = 11 : i64} {
  func.func @readout_kernel(%arg0: i32, %arg1: i32, %arg2: memref<1x16xi32, #tpu.memory_space<vmem>>, %arg3: memref<16x128xf32, #tpu.memory_space<vmem>>, %arg4: memref<8x1xf32, #tpu.memory_space<vmem>>, %arg5: memref<8x128xf32, #tpu.memory_space<vmem>>, %arg6: memref<8x128xf32, #tpu.memory_space<vmem>>) attributes {dimension_semantics = [#tpu.dimension_semantics<parallel>, #tpu.dimension_semantics<arbitrary>], iteration_bounds = array<i64: 1, 1>, scalar_prefetch = 0 : i64, scratch_operands = 1 : i64, tpu.core_type = #tpu.core_type<tc>, window_params = [{transform_indices = @transform_0, window_bounds = array<i64: 1, 16>}, {transform_indices = @transform_1, window_bounds = array<i64: 16, 128>}, {pipeline_mode = #tpu.pipeline_mode<synchronous>, transform_indices = @transform_2, window_bounds = array<i64: 8, 1>}, {transform_indices = @transform_3, window_bounds = array<i64: 8, 128>}]} {
    %c0_i32 = arith.constant 0 : i32
    %0 = arith.cmpi eq, %arg1, %c0_i32 : i32
    %1 = arith.extui %0 : i1 to i32
    %c0_i32_0 = arith.constant 0 : i32
    %2 = arith.cmpi ne, %1, %c0_i32_0 : i32
    scf.if %2 {
      %cst_10 = arith.constant 0.000000e+00 : f32
      %17 = vector.broadcast %cst_10 : f32 to vector<8x128xf32>
      %c0_11 = arith.constant 0 : index
      %c0_12 = arith.constant 0 : index
      %18 = vector.load %arg6[%c0_11, %c0_12] : memref<8x128xf32, #tpu.memory_space<vmem>>, vector<8x128xf32>
      tpu.vector_store %arg6[%c0_11, %c0_12], %17 {strides = array<i32>} : memref<8x128xf32, #tpu.memory_space<vmem>>, vector<8x128xf32>,
    } else {
    }
    %c0 = arith.constant 0 : index
    %c0_1 = arith.constant 0 : index
    %3 = vector.load %arg2[%c0, %c0_1] : memref<1x16xi32, #tpu.memory_space<vmem>>, vector<1x16xi32>
    %c0_2 = arith.constant 0 : index
    %c0_3 = arith.constant 0 : index
    %4 = vector.load %arg3[%c0_2, %c0_3] : memref<16x128xf32, #tpu.memory_space<vmem>>, vector<16x128xf32>
    %5 = tpu.iota {dimensions = array<i32: 0>} : vector<8x16xi32>
    %6 = vector.broadcast %3 : vector<1x16xi32> to vector<8x16xi32>
    %7 = arith.cmpi eq, %5, %6 : vector<8x16xi32>
    %8 = arith.extui %7 : vector<8x16xi1> to vector<8x16xi32>
    %9 = arith.sitofp %8 : vector<8x16xi32> to vector<8x16xf32>
    %c0_4 = arith.constant 0 : index
    %c0_5 = arith.constant 0 : index
    %10 = vector.load %arg6[%c0_4, %c0_5] : memref<8x128xf32, #tpu.memory_space<vmem>>, vector<8x128xf32>
    %cst = arith.constant dense<0.000000e+00> : vector<8x128xf32>
    %11 = tpu.matmul %9, %4, %cst {dimension_numbers = #tpu.dot_dimension_numbers<[1], [0], [0], [1], [0, 0, 1, 1], [], []>} : vector<8x16xf32>, vector<16x128xf32>, vector<8x128xf32> -> vector<8x128xf32>
    %12 = arith.addf %10, %11 : vector<8x128xf32>
    %c0_6 = arith.constant 0 : index
    %c0_7 = arith.constant 0 : index
    %13 = vector.load %arg6[%c0_6, %c0_7] : memref<8x128xf32, #tpu.memory_space<vmem>>, vector<8x128xf32>
    tpu.vector_store %arg6[%c0_6, %c0_7], %12 {strides = array<i32>} : memref<8x128xf32, #tpu.memory_space<vmem>>, vector<8x128xf32>,
    %c0_i32_8 = arith.constant 0 : i32
    %14 = arith.cmpi eq, %arg1, %c0_i32_8 : i32
    %15 = arith.extui %14 : i1 to i32
    %c0_i32_9 = arith.constant 0 : i32
    %16 = arith.cmpi ne, %15, %c0_i32_9 : i32
    scf.if %16 {
      %c0_10 = arith.constant 0 : index
      %c0_11 = arith.constant 0 : index
      %17 = vector.load %arg6[%c0_10, %c0_11] : memref<8x128xf32, #tpu.memory_space<vmem>>, vector<8x128xf32>
      %c0_12 = arith.constant 0 : index
      %c0_13 = arith.constant 0 : index
      %18 = vector.load %arg4[%c0_12, %c0_13] : memref<8x1xf32, #tpu.memory_space<vmem>>, vector<8x1xf32>
      %19 = vector.broadcast %18 : vector<8x1xf32> to vector<8x128xf32>
      %20 = arith.mulf %17, %19 : vector<8x128xf32>
      %c0_14 = arith.constant 0 : index
      %c0_15 = arith.constant 0 : index
      %21 = vector.load %arg5[%c0_14, %c0_15] : memref<8x128xf32, #tpu.memory_space<vmem>>, vector<8x128xf32>
      tpu.vector_store %arg5[%c0_14, %c0_15], %20 {strides = array<i32>} : memref<8x128xf32, #tpu.memory_space<vmem>>, vector<8x128xf32>,
    } else {
    }
    return
  }
  func.func @transform_0(%arg0: i32, %arg1: i32) -> (i32, i32) {
    %c0_i32 = arith.constant 0 : i32
    %c0_i32_0 = arith.constant 0 : i32
    return %c0_i32, %arg1 : i32, i32
  }
  func.func @transform_1(%arg0: i32, %arg1: i32) -> (i32, i32) {
    %c0_i32 = arith.constant 0 : i32
    return %arg1, %arg0 : i32, i32
  }
  func.func @transform_2(%arg0: i32, %arg1: i32) -> (i32, i32) {
    %c0_i32 = arith.constant 0 : i32
    %c0_i32_0 = arith.constant 0 : i32
    %c0_i32_1 = arith.constant 0 : i32
    return %c0_i32, %c0_i32_0 : i32, i32
  }
  func.func @transform_3(%arg0: i32, %arg1: i32) -> (i32, i32) {
    %c0_i32 = arith.constant 0 : i32
    %c0_i32_0 = arith.constant 0 : i32
    return %c0_i32, %arg0 : i32, i32
  }
}

</mosaic_0001>

<llo_original>
// kernel: readout.1
$region0: #{readout.1}
  #allocation0 [shape = 'u32[]', space=smem, size = 0x4, offset = 0x4, fixed_abs, tag = 'smem constant byte address 0x4 - core index']
  #allocation1 [shape = 'u32[144,128]{1,0:T(1,128)}', space=vmem, size = 0x12000, scoped, tag = 'internal scratch']
  #allocation2 [shape = 'f32[8,128]{1,0:T(8,128)}', space=vmem, size = 0x1000, scoped, tag = 'scratch operand']
  %s0 = inlined_call_operand.vmem [shape: s32[1,16], index: 0, kind: input, shape index: {}]
  %s1 = inlined_call_operand.vmem [shape: f32[16,128], index: 1, kind: input, shape index: {}]
  %s2 = inlined_call_operand.vmem [shape: f32[8,1], index: 2, kind: input, shape index: {}]
  %s3 = inlined_call_operand.vmem [shape: f32[8,128], index: 3, kind: output, shape index: {}]
  %s4 = sld [smem:[#allocation0]]
  $region30: #{readout.1} parent=0
    _
  %s6 = ssub.s32 1, %s4
  %s7 = scalar_select 0, %s6, %s4
  // Predicated region
  $region2: #{readout.1} parent=0 // pred_check
    _
  $region3: #{readout.1} parent=0 // pred_check_branch
    %9 = sbr.rel (0) target = $region5
  $region4: #{readout.1} parent=0 // pred_region
    _
  $region5: #{readout.1} parent=0 // pred_fallthru
    _
  // Predicated region
  $region6: #{readout.1} parent=0 // pred_check
    _
  $region7: #{readout.1} parent=0 // pred_check_branch
    %11 = sbr.rel (0) target = $region9
  $region8: #{readout.1} parent=0 // pred_region
    _
  $region9: #{readout.1} parent=0 // pred_fallthru
    _
  // Predicated region
  $region10: #{readout.1} parent=0 // pred_check
    _
  $region11: #{readout.1} parent=0 // pred_check_branch
    %13 = sbr.rel (0) target = $region13
  $region12: #{readout.1} parent=0 // pred_region
    _
  $region13: #{readout.1} parent=0 // pred_fallthru
    _
  %p14 = scmp.eq.s32.totalorder 0, 0
  // Predicated region
  $region14: #{readout.1} parent=0 // pred_check
    %p15 = pneg %p14
  $region15: #{readout.1} parent=0 // pred_check_branch
    %17 = sbr.rel (%p15) target = $region17
  $region16: #{readout.1} parent=0 // pred_region
    %18 = vst [vmem:[#allocation2] sm:$0xff] 0.0
  $region17: #{readout.1} parent=0 // pred_fallthru
    _
  %v19 = vld [vmem:[%s0] sm:$0x1]
  %v20 = vld [vmem:[%s1] sm:$0xff]
  %v21 = vld [vmem:[%s1 + $0x8] sm:$0xff]
  %v22 = vlaneseq
  %v23 = vshrl.u32 %v22, 7
  %v24 = vlaneseq
  %v25 = vshrl.u32 %v24, 7
  %v26 = vsub.s32 0, %v25
  %v27 = vrot.slane %v19, %v26
  %vm28 = vcmp.eq.s32.totalorder %v23, %v27
  %v29 = vsel %vm28, 1, 0
  %v30 = vcvt.s32.f32 %v29
  %v31 = vld [vmem:[#allocation2] sm:$0xff]
  %vm32 = vcmask 130048
  %v34 = vsel %vm32, %v30, 0
  %36 = vmatprep.subr.mxu0 0.0
  %37 = vmatpush1.msra.mxu0 0.0
  %38 = vmatprep.subr.mxu0 0.0
  %39 = vmatpush1.msra.mxu0 0.0
  %40 = vmatprep.subr.mxu0 0.0
  %41 = vmatpush1.msra.mxu0 0.0
  %42 = vmatprep.subr.mxu0 0.0
  %43 = vmatpush1.msra.mxu0 0.0
  %44 = vmatprep.subr.mxu0 0.0
  %45 = vmatpush1.msra.mxu0 0.0
  %46 = vmatprep.subr.mxu0 0.0
  %47 = vmatpush1.msra.mxu0 0.0
  %48 = vmatprep.subr.mxu0 0.0
  %49 = vmatpush1.msra.mxu0 0.0
  %50 = vmatprep.subr.mxu0 0.0
  %51 = vmatpush1.msra.mxu0 0.0
  %52 = vmatprep.subr.mxu0 0.0
  %53 = vmatpush1.msra.mxu0 0.0
  %54 = vmatprep.subr.mxu0 0.0
  %55 = vmatpush1.msra.mxu0 0.0
  %56 = vmatprep.subr.mxu0 0.0
  %57 = vmatpush1.msra.mxu0 0.0
  %58 = vmatprep.subr.mxu0 0.0
  %59 = vmatpush1.msra.mxu0 0.0
  %60 = vmatprep.subr.mxu0 0.0
  %61 = vmatpush1.msra.mxu0 0.0
  %62 = vmatprep.subr.mxu0 0.0
  %63 = vmatpush1.msra.mxu0 0.0
  %64 = vmatprep.subr.mxu0 0.0
  %65 = vmatpush1.msra.mxu0 %v21
  %66 = vmatprep.subr.mxu0 0.0
  %67 = vmatpush1.msra.mxu0 %v20
  %68 = vmatprep.subr.mxu0 0.0
  %69 = vmatpush2.msra.mxu0 0.0
  %70 = vmatprep.subr.mxu0 0.0
  %71 = vmatpush2.msra.mxu0 0.0
  %72 = vmatprep.subr.mxu0 0.0
  %73 = vmatpush2.msra.mxu0 0.0
  %74 = vmatprep.subr.mxu0 0.0
  %75 = vmatpush2.msra.mxu0 0.0
  %76 = vmatprep.subr.mxu0 0.0
  %77 = vmatpush2.msra.mxu0 0.0
  %78 = vmatprep.subr.mxu0 0.0
  %79 = vmatpush2.msra.mxu0 0.0
  %80 = vmatprep.subr.mxu0 0.0
  %81 = vmatpush2.msra.mxu0 0.0
  %82 = vmatprep.subr.mxu0 0.0
  %83 = vmatpush2.msra.mxu0 0.0
  %84 = vmatprep.subr.mxu0 0.0
  %85 = vmatpush2.msra.mxu0 0.0
  %86 = vmatprep.subr.mxu0 0.0
  %87 = vmatpush2.msra.mxu0 0.0
  %88 = vmatprep.subr.mxu0 0.0
  %89 = vmatpush2.msra.mxu0 0.0
  %90 = vmatprep.subr.mxu0 0.0
  %91 = vmatpush2.msra.mxu0 0.0
  %92 = vmatprep.subr.mxu0 0.0
  %93 = vmatpush2.msra.mxu0 0.0
  %94 = vmatprep.subr.mxu0 0.0
  %95 = vmatpush2.msra.mxu0 0.0
  %96 = vmatprep.subr.mxu0 0.0
  %97 = vmatpush2.msra.mxu0 0.0
  %98 = vmatprep.subr.mxu0 0.0
  %99 = vmatpush2.msra.mxu0 0.0
  %100 = vmatprep.mubr.f32.mxu0 0.0
  %101 = vmatmul.mubr.f32.gmra.mxu0 %v34
  %v102 = vpop.f32.mrf.mxu0
  %v103 = vadd.f32 0.0, %v102
  %v104 = vpop.f32.mrf.mxu0
  %105 = vdwg.mxu0
  %v106 = vadd.f32 %v31, %v103
  %107 = vst [vmem:[#allocation2] sm:$0xff] %v106
  // Predicated region
  $region18: #{readout.1} parent=0 // pred_check
    %p108 = pneg %p14
  $region19: #{readout.1} parent=0 // pred_check_branch
    %110 = sbr.rel (%p108) target = $region21
  $region20: #{readout.1} parent=0 // pred_region
    %v111 = vld [vmem:[#allocation2] sm:$0xff]
    %v112 = vld [vmem:[%s2] sm:$0xff]
    %114 = vset.pattern.permute.xlu0 0
    %115 = vperm.xlu0 %114, %v112
    %v116 = vpop.permute.xlu0 %115
    %v118 = vmul.f32 %v111, %v116
    %119 = vst [vmem:[%s3] sm:$0xff] %v118
  $region21: #{readout.1} parent=0 // pred_fallthru
    _
  // Predicated region
  $region22: #{readout.1} parent=0 // pred_check
    _
  $region23: #{readout.1} parent=0 // pred_check_branch
    %121 = sbr.rel (0) target = $region25
  $region24: #{readout.1} parent=0 // pred_region
    _
  $region25: #{readout.1} parent=0 // pred_fallthru
    _
  // Predicated region
  $region26: #{readout.1} parent=0 // pred_check
    _
  $region27: #{readout.1} parent=0 // pred_check_branch
    %123 = sbr.rel (0) target = $region29
  $region28: #{readout.1} parent=0 // pred_region
    _
  $region29: #{readout.1} parent=0 // pred_fallthru
    _

</llo_original>
